<compile_context>
chip_gen: v7x
topology: tpu7x:2x2x1
jax: 0.10.0
libtpu: 0.0.40
codegen_flags: <defaults>
</compile_context>

<pallas_src>
import jax
import jax.numpy as jnp
import numpy as np
from jax import lax
from jax.experimental import pallas as pl
from jax.experimental.pallas import tpu as pltpu


def _round_up(a, b):
    return (a + b - 1) // b * b


def _cdiv(a, b):
    return (a + b - 1) // b


def _pick_t_tile(C, T128, itemsize, granule, budget_bytes=24 * 1024 * 1024):
    """Largest lane tile (multiple of 128) whose double-buffered, sublane-padded
    working set (x block + y block + mask block) fits the VMEM budget."""
    C_pad = _round_up(max(C, 1), granule)
    bytes_per_col = 2 * (2 * C_pad + granule) * itemsize   # x + y + mask, x2 buffers
    tt = (budget_bytes // bytes_per_col) // 128 * 128
    return int(max(128, min(tt, T128)))


def _vmem_limit(C, tt, itemsize, granule, n_extra_f32_blocks):
    """Right-sized scoped-VMEM request for this call (working set + margin)."""
    C_pad = _round_up(max(C, 1), granule)
    ws = 2 * (2 * C_pad + granule) * tt * itemsize          # pipelined x / y / mask
    ws += n_extra_f32_blocks * 2 * 8 * 128 * 4              # mask-sum partial blocks
    ws += 2 * 8 * 128 * 4                                   # resident m / scale
    return int(min(max(ws + (4 << 20), 16 << 20), 100 << 20))


# ------------------------------------------------------------------
# Kernels
# ------------------------------------------------------------------
def _make_fwd_kernel(T, tt, ragged):
    def kernel(x_ref, mask_ref, m_ref, scale_ref, y_ref, msum_ref):
        x = x_ref[0]                      # (C, tt)
        mask = mask_ref[0]                # (1, tt) -> broadcasts over C
        y = (m_ref[...] + scale_ref[...] * x) * mask
        y_ref[0] = y.astype(y_ref.dtype)  # OOB lanes of a ragged tile are dropped

        # Per-tile mask sum (for logdet), accumulated in f32.
        maskf = mask.astype(jnp.float32)
        if ragged:
            # Zero out lanes beyond the true T in the last (ragged) tile.
            start = pl.program_id(1) * tt
            lane = lax.broadcasted_iota(jnp.int32, maskf.shape, 1)
            maskf = jnp.where(start + lane < T, maskf, 0.0)
        msum_ref[...] = jnp.broadcast_to(jnp.sum(maskf), msum_ref.shape)

    return kernel


def _rev_kernel(x_ref, mask_ref, m_ref, inv_scale_ref, y_ref):
    x = x_ref[0]                          # (C, tt)
    y = (x - m_ref[...]) * inv_scale_ref[...] * mask_ref[0]
    y_ref[0] = y.astype(y_ref.dtype)


# ------------------------------------------------------------------
# Wrapper
# ------------------------------------------------------------------
def elementwise_affine(x, x_mask, m, logs, *, reverse=False, t_tile=None):
    """ElementwiseAffine.

    x: (B, C, T), x_mask: (B, 1, T), m: (C, 1), logs: (C, 1).
    reverse=False -> (y, logdet); reverse=True -> x_reconstructed.
    """
    B, C, T = x.shape
    assert x_mask.shape == (B, 1, T)
    m = jnp.asarray(m, jnp.float32).reshape(C, 1)
    logs = jnp.asarray(logs, jnp.float32).reshape(C, 1)

    # Compute dtype: bf16 stays bf16 (v6e/v7x bf16 VPU), everything else in f32.
    cdtype = jnp.bfloat16 if x.dtype == jnp.bfloat16 else jnp.float32
    itemsize = jnp.dtype(x.dtype).itemsize
    granule = max(8, 32 // max(itemsize, 1))   # sublane granule: 8 (f32), 16 (bf16)

    T128 = _round_up(T, 128)
    if t_tile is None:
        tt = _pick_t_tile(C, T128, itemsize, granule)
    else:
        tt = int(min(_round_up(max(int(t_tile), 128), 128), T128))
    nT = _cdiv(T, tt)
    ragged = (T % tt) != 0

    m_c = m.astype(cdtype)

    x_spec = pl.BlockSpec((1, C, tt), lambda b, t: (b, 0, t))
    mask_spec = pl.BlockSpec((1, 1, tt), lambda b, t: (b, 0, t))
    param_spec = pl.BlockSpec((C, 1), lambda b, t: (0, 0))     # VMEM resident
    y_spec = pl.BlockSpec((1, C, tt), lambda b, t: (b, 0, t))
    grid = (B, nT)
    dim_sem = ("parallel", "parallel")   # no accumulator -> megacore-friendly

    if reverse:
        inv_scale = jnp.exp(-logs).astype(cdtype)   # hoisted, one-time O(C)
        y = pl.pallas_call(
            _rev_kernel,
            out_shape=jax.ShapeDtypeStruct((B, C, T), x.dtype),
            grid=grid,
            in_specs=[x_spec, mask_spec, param_spec, param_spec],
            out_specs=y_spec,
            compiler_params=pltpu.CompilerParams(
                dimension_semantics=dim_sem,
                vmem_limit_bytes=_vmem_limit(C, tt, itemsize, granule, 0)),
        )(x, x_mask, m_c, inv_scale)
        return y

    scale = jnp.exp(logs).astype(cdtype)             # hoisted, one-time O(C)
    y, msum = pl.pallas_call(
        _make_fwd_kernel(T, tt, ragged),
        out_shape=(jax.ShapeDtypeStruct((B, C, T), x.dtype),
                   jax.ShapeDtypeStruct((B, 1, nT * 128), jnp.float32)),
        grid=grid,
        in_specs=[x_spec, mask_spec, param_spec, param_spec],
        out_specs=(y_spec, pl.BlockSpec((1, 1, 128), lambda b, t: (b, 0, t))),
        compiler_params=pltpu.CompilerParams(
            dimension_semantics=dim_sem,
            vmem_limit_bytes=_vmem_limit(C, tt, itemsize, granule, 1)),
    )(x, x_mask, m_c, scale)

    # Tiny wrapper-side reduction of the per-(batch, tile) mask sums.
    mask_sums = msum.reshape(B, nT, 128)[:, :, 0]               # (B, nT)
    logdet = jnp.sum(logs) * jnp.sum(mask_sums, axis=-1)        # (B,)
    return y, logdet


# ------------------------------------------------------------------
# Pure-JAX reference (for correctness check)
# ------------------------------------------------------------------
def elementwise_affine_reference(x, x_mask, m, logs, reverse=False):
    if not reverse:
        y = (m[None] + jnp.exp(logs)[None] * x) * x_mask
        logdet = jnp.sum(logs[None] * x_mask, axis=(1, 2))
        return y, logdet
    return (x - m[None]) * jnp.exp(-logs)[None] * x_mask


if __name__ == "__main__":
    key = jax.random.PRNGKey(0)
    B, C, T = 2, 4, 200   # T not a multiple of 128 -> exercises the ragged-tile path

    k1, k2, k3 = jax.random.split(key, 3)
    x = jax.random.normal(k1, (B, C, T), jnp.float32)
    # mask with a zeroed tail on the second sequence (crosses a tile boundary)
    x_mask = jnp.ones((B, 1, T), jnp.float32).at[1, 0, 150:].set(0.0)
    m = 0.1 * jax.random.normal(k2, (C, 1), jnp.float32)
    logs = 0.1 * jax.random.normal(k3, (C, 1), jnp.float32)

    y_ref, logdet_ref = elementwise_affine_reference(x, x_mask, m, logs)

    # forward, multi-tile path (tt=128 -> 2 tiles, last one ragged)
    y, logdet = elementwise_affine(x, x_mask, m, logs, t_tile=128)
    jax.block_until_ready((y, logdet))
    np.testing.assert_allclose(np.asarray(y), np.asarray(y_ref),
                               rtol=1e-5, atol=1e-5)
    np.testing.assert_allclose(np.asarray(logdet), np.asarray(logdet_ref),
                               rtol=1e-5, atol=1e-5)

    # forward, auto-sized tile (single ragged tile covering all of T)
    y2, logdet2 = elementwise_affine(x, x_mask, m, logs)
    jax.block_until_ready((y2, logdet2))
    np.testing.assert_allclose(np.asarray(y2), np.asarray(y_ref),
                               rtol=1e-5, atol=1e-5)
    np.testing.assert_allclose(np.asarray(logdet2), np.asarray(logdet_ref),
                               rtol=1e-5, atol=1e-5)

    # reverse path: reverse(forward(x)) == x * mask
    x_rec = elementwise_affine(y, x_mask, m, logs, reverse=True, t_tile=128)
    x_rec = jax.block_until_ready(x_rec)
    np.testing.assert_allclose(np.asarray(x_rec), np.asarray(x * x_mask),
                               rtol=1e-5, atol=1e-5)

    print("KERNEL_OK")
</pallas_src>

<mosaic_0001>
module attributes {stable_mosaic.version = 11 : i64} {
  func.func @kernel(%arg0: i32, %arg1: i32, %arg2: memref<1x4x128xf32, #tpu.memory_space<vmem>>, %arg3: memref<1x1x128xf32, #tpu.memory_space<vmem>>, %arg4: memref<4x1xf32, #tpu.memory_space<vmem>>, %arg5: memref<4x1xf32, #tpu.memory_space<vmem>>, %arg6: memref<1x4x128xf32, #tpu.memory_space<vmem>>, %arg7: memref<1x1x128xf32, #tpu.memory_space<vmem>>) attributes {dimension_semantics = [#tpu.dimension_semantics<parallel>, #tpu.dimension_semantics<parallel>], iteration_bounds = array<i64: 2, 2>, scalar_prefetch = 0 : i64, scratch_operands = 0 : i64, tpu.core_type = #tpu.core_type<tc>, window_params = [{transform_indices = @transform_0, window_bounds = array<i64: 1, 4, 128>}, {transform_indices = @transform_1, window_bounds = array<i64: 1, 1, 128>}, {pipeline_mode = #tpu.pipeline_mode<synchronous>, transform_indices = @transform_2, window_bounds = array<i64: 4, 1>}, {pipeline_mode = #tpu.pipeline_mode<synchronous>, transform_indices = @transform_3, window_bounds = array<i64: 4, 1>}, {transform_indices = @transform_4, window_bounds = array<i64: 1, 4, 128>}, {transform_indices = @transform_5, window_bounds = array<i64: 1, 1, 128>}]} {
    %c0 = arith.constant 0 : index
    %c0_0 = arith.constant 0 : index
    %c0_1 = arith.constant 0 : index
    %0 = vector.load %arg2[%c0, %c0_0, %c0_1] : memref<1x4x128xf32, #tpu.memory_space<vmem>>, vector<1x4x128xf32>
    %1 = vector.shape_cast %0 : vector<1x4x128xf32> to vector<4x128xf32>
    %c0_2 = arith.constant 0 : index
    %c0_3 = arith.constant 0 : index
    %c0_4 = arith.constant 0 : index
    %2 = vector.load %arg3[%c0_2, %c0_3, %c0_4] : memref<1x1x128xf32, #tpu.memory_space<vmem>>, vector<1x1x128xf32>
    %3 = vector.shape_cast %2 : vector<1x1x128xf32> to vector<1x128xf32>
    %c0_5 = arith.constant 0 : index
    %c0_6 = arith.constant 0 : index
    %4 = vector.load %arg4[%c0_5, %c0_6] : memref<4x1xf32, #tpu.memory_space<vmem>>, vector<4x1xf32>
    %c0_7 = arith.constant 0 : index
    %c0_8 = arith.constant 0 : index
    %5 = vector.load %arg5[%c0_7, %c0_8] : memref<4x1xf32, #tpu.memory_space<vmem>>, vector<4x1xf32>
    %6 = vector.broadcast %5 : vector<4x1xf32> to vector<4x128xf32>
    %7 = arith.mulf %6, %1 : vector<4x128xf32>
    %8 = vector.broadcast %4 : vector<4x1xf32> to vector<4x128xf32>
    %9 = arith.addf %8, %7 : vector<4x128xf32>
    %10 = vector.broadcast %3 : vector<1x128xf32> to vector<4x128xf32>
    %11 = arith.mulf %9, %10 : vector<4x128xf32>
    %c0_9 = arith.constant 0 : index
    %c0_10 = arith.constant 0 : index
    %c0_11 = arith.constant 0 : index
    %12 = vector.load %arg6[%c0_9, %c0_10, %c0_11] : memref<1x4x128xf32, #tpu.memory_space<vmem>>, vector<1x4x128xf32>
    %13 = vector.shape_cast %12 : vector<1x4x128xf32> to vector<4x128xf32>
    %14 = vector.shape_cast %11 : vector<4x128xf32> to vector<1x4x128xf32>
    tpu.vector_store %arg6[%c0_9, %c0_10, %c0_11], %14 {strides = array<i32>} : memref<1x4x128xf32, #tpu.memory_space<vmem>>, vector<1x4x128xf32>,
    %c128_i32 = arith.constant 128 : i32
    %15 = arith.muli %arg1, %c128_i32 : i32
    %16 = tpu.iota {dimensions = array<i32: 1>} : vector<1x128xi32>
    %17 = vector.broadcast %15 : i32 to vector<1x128xi32>
    %18 = arith.addi %17, %16 : vector<1x128xi32>
    %c200_i32 = arith.constant 200 : i32
    %19 = vector.broadcast %c200_i32 : i32 to vector<1x128xi32>
    %20 = arith.cmpi slt, %18, %19 : vector<1x128xi32>
    %cst = arith.constant 0.000000e+00 : f32
    %21 = vector.broadcast %cst : f32 to vector<1x128xf32>
    %22 = arith.select %20, %3, %21 : vector<1x128xi1>, vector<1x128xf32>
    %23 = vector.shape_cast %22 : vector<1x128xf32> to vector<1x1x128xf32>
    %cst_12 = arith.constant dense<0.000000e+00> : vector<1xf32>
    %24 = vector.multi_reduction <add>, %23, %cst_12 [1, 2] : vector<1x1x128xf32> to vector<1xf32>
    %25 = vector.shape_cast %24 : vector<1xf32> to vector<1x1x1xf32>
    %26 = vector.extract %25[0, 0, 0] : f32 from vector<1x1x1xf32>
    %27 = vector.broadcast %26 : f32 to vector<1x1x128xf32>
    %c0_13 = arith.constant 0 : index
    %c0_14 = arith.constant 0 : index
    %c0_15 = arith.constant 0 : index
    %28 = vector.load %arg7[%c0_13, %c0_14, %c0_15] : memref<1x1x128xf32, #tpu.memory_space<vmem>>, vector<1x1x128xf32>
    tpu.vector_store %arg7[%c0_13, %c0_14, %c0_15], %27 {strides = array<i32>} : memref<1x1x128xf32, #tpu.memory_space<vmem>>, vector<1x1x128xf32>,
    return
  }
  func.func @transform_0(%arg0: i32, %arg1: i32) -> (i32, i32, i32) {
    %c0_i32 = arith.constant 0 : i32
    %c0_i32_0 = arith.constant 0 : i32
    return %arg0, %c0_i32, %arg1 : i32, i32, i32
  }
  func.func @transform_1(%arg0: i32, %arg1: i32) -> (i32, i32, i32) {
    %c0_i32 = arith.constant 0 : i32
    %c0_i32_0 = arith.constant 0 : i32
    return %arg0, %c0_i32, %arg1 : i32, i32, i32
  }
  func.func @transform_2(%arg0: i32, %arg1: i32) -> (i32, i32) {
    %c0_i32 = arith.constant 0 : i32
    %c0_i32_0 = arith.constant 0 : i32
    %c0_i32_1 = arith.constant 0 : i32
    return %c0_i32, %c0_i32_0 : i32, i32
  }
  func.func @transform_3(%arg0: i32, %arg1: i32) -> (i32, i32) {
    %c0_i32 = arith.constant 0 : i32
    %c0_i32_0 = arith.constant 0 : i32
    %c0_i32_1 = arith.constant 0 : i32
    return %c0_i32, %c0_i32_0 : i32, i32
  }
  func.func @transform_4(%arg0: i32, %arg1: i32) -> (i32, i32, i32) {
    %c0_i32 = arith.constant 0 : i32
    %c0_i32_0 = arith.constant 0 : i32
    return %arg0, %c0_i32, %arg1 : i32, i32, i32
  }
  func.func @transform_5(%arg0: i32, %arg1: i32) -> (i32, i32, i32) {
    %c0_i32 = arith.constant 0 : i32
    %c0_i32_0 = arith.constant 0 : i32
    return %arg0, %c0_i32, %arg1 : i32, i32, i32
  }
}

</mosaic_0001>

<llo_original>
// kernel: tpu_custom_call.1
$region0: #{tpu_custom_call.1}
  #allocation0 [shape = 'u32[]', space=smem, size = 0x4, offset = 0x4, fixed_abs, tag = 'smem constant byte address 0x4 - core index']
  #allocation1 [shape = 'u32[144,128]{1,0:T(1,128)}', space=vmem, size = 0x12000, scoped, tag = 'internal scratch']
  %s0 = inlined_call_operand.hbm [shape: f32[2,4,200], index: 0, kind: input, shape index: {}]
  %s1 = inlined_call_operand.vmem [shape: f32[2,1,200], index: 1, kind: input, shape index: {}]
  %s2 = inlined_call_operand.vmem [shape: f32[4,1], index: 2, kind: input, shape index: {}]
  %s3 = inlined_call_operand.vmem [shape: f32[4,1], index: 3, kind: input, shape index: {}]
  %s4 = inlined_call_operand.hbm [shape: f32[2,4,200], index: 4, kind: output, shape index: {0}]
  %s5 = inlined_call_operand.hbm [shape: f32[2,1,256], index: 5, kind: output, shape index: {1}]
  %6 = xla_tuple %s4, %s5
  %s7 = sld [smem:[#allocation0]]
  $region61: #{tpu_custom_call.1} parent=0
    _
  %s9 = ssub.s32 1, %s7
  %s10 = scalar_select 0, %s9, %s7
  $region1: #{tpu_custom_call.1} parent=0
    #allocation2 [shape = 'u8[4096]{0}', space=vmem, size = 0x1000, scoped, tag = 'input window, operand 0']
    #allocation3 [shape = 's32[2]{0}', space=sflag, size = 0x8, scoped, tag = 'scoped memory for tpu_custom_call.1']
    #allocation4 [shape = 's32[2]{0}', space=sflag, size = 0x8, scoped, tag = 'scoped memory for tpu_custom_call.1']
    #allocation5 [shape = 'u8[4096]{0}', space=vmem, size = 0x1000, scoped, tag = 'output window, operand 0']
    #allocation6 [shape = 'u8[1024]{0}', space=vmem, size = 0x400, scoped, tag = 'output window, operand 1']
    #allocation7 [shape = 's32[2]{0}', space=sflag, size = 0x8, scoped, tag = 'scoped memory for tpu_custom_call.1']
    %11 = vsyncpa [#allocation3], 0
    %s12 = scalar_lea.sflag [#allocation3], 1
    %13 = vsyncpa %s12, 0
    %14 = vsyncpa [#allocation4], 0
    %s15 = scalar_lea.sflag [#allocation4], 1
    %16 = vsyncpa %s15, 0
    %17 = vsyncpa [#allocation7], 0
    %s18 = scalar_lea.sflag [#allocation7], 1
    %19 = vsyncpa %s18, 0
    loop: start=0, step=1, limit=6
    $region2: #{tpu_custom_call.1} parent=1 // loop_pre_header
      _
    $region3: #{tpu_custom_call.1} parent=1 // loop_header
      %s21 = sphi 0, %s25
      %p22 = scmp.ge.s32.totalorder %s21, 6
      %s28 = sphi 0, %s40
      %s29 = sphi 0, %s36
      %s30 = sphi 0, %s28
      %s31 = sphi 0, %s29
      %s32 = sphi 0, %s30
      %s33 = sphi 0, %s31
      %s45 = sphi 0, %s47
      %s48 = sphi 0, %s45
      %s49 = sphi 0, %s48
      %s65 = sphi 0, %s49
      %s73 = sphi 0, %s75
      %s76 = sphi 0, %s73
      %s77 = sphi 0, %s76
      %s93 = sphi 0, %s77
      %s97 = sphi 0, %s97
      %s99 = sphi 0, %s97
      %s100 = sphi 0, %s99
      %s114 = sphi 0, %s100
      %s118 = sphi 0, %s118
      %s120 = sphi 0, %s118
      %s121 = sphi 0, %s120
      %s135 = sphi 0, %s121
      %s143 = sphi 0, %s145
      %s146 = sphi 0, %s143
      %s147 = sphi 0, %s146
      %s163 = sphi 0, %s147
      %s171 = sphi 0, %s173
      %s174 = sphi 0, %s171
      %s175 = sphi 0, %s174
      %s191 = sphi 0, %s175
    $region4: #{tpu_custom_call.1} parent=1 // loop_header_branch
      %24 = sbr.rel (%p22) target = $region8
    $region5: #{tpu_custom_call.1} parent=1 // loop_body
      %s26 = ssub.s32 %s21, 1
      %s27 = ssub.s32 %s21, 2
      %s34 = sadd.s32 1, %s29
      %p35 = scmp.ge.s32.totalorder %s34, 2
      %s36 = scalar_select %p35, 0, %s34
      %s37 = sadd.s32 1, %s28
      %s38 = scalar_select %p35, %s37, %s28
      %p39 = scmp.ge.s32.totalorder %s38, 2
      %s40 = scalar_select %p39, 0, %s38
      %s41 = ssub.s32 %s28, %s40
      %s42 = ssub.s32 %s29, %s36
      %s43 = sor.u32 %s41, %s42
      %p44 = scmp.eq.s32.totalorder %s43, 0
      %s46 = sadd.s32 %s45, 1
      %s47 = scalar_select %p44, %s45, %s46
      %p50 = pneg %p44
      %p51 = scmp.eq.s32.totalorder %s21, 3
      %p52 = por %p50, %p51
      %p53 = scmp.ne.s32.totalorder %s45, %s48
      %p54 = scmp.eq.s32.totalorder %s21, 0
      %p55 = por %p53, %p54
      %p56 = scmp.ne.s32.totalorder %s45, %s48
      %p57 = scmp.eq.s32.totalorder %s26, 3
      %p58 = por %p56, %p57
      %p59 = scmp.ne.s32.totalorder %s48, %s49
      %p60 = scmp.eq.s32.totalorder %s26, 0
      %p61 = por %p59, %p60
      %p62 = scmp.ne.s32.totalorder %s48, %s49
      %p63 = scmp.eq.s32.totalorder %s27, 3
      %p64 = por %p62, %p63
      %p66 = scmp.ne.s32.totalorder %s49, %s65
      %p67 = scmp.eq.s32.totalorder %s27, 0
      %p68 = por %p66, %p67
      %s69 = ssub.s32 %s28, %s40
      %s70 = ssub.s32 %s29, %s36
      %s71 = sor.u32 %s69, %s70
      %p72 = scmp.eq.s32.totalorder %s71, 0
      %s74 = sadd.s32 %s73, 1
      %s75 = scalar_select %p72, %s73, %s74
      %p78 = pneg %p72
      %p79 = scmp.eq.s32.totalorder %s21, 3
      %p80 = por %p78, %p79
      %p81 = scmp.ne.s32.totalorder %s73, %s76
      %p82 = scmp.eq.s32.totalorder %s21, 0
      %p83 = por %p81, %p82
      %p84 = scmp.ne.s32.totalorder %s73, %s76
      %p85 = scmp.eq.s32.totalorder %s26, 3
      %p86 = por %p84, %p85
      %p87 = scmp.ne.s32.totalorder %s76, %s77
      %p88 = scmp.eq.s32.totalorder %s26, 0
      %p89 = por %p87, %p88
      %p90 = scmp.ne.s32.totalorder %s76, %s77
      %p91 = scmp.eq.s32.totalorder %s27, 3
      %p92 = por %p90, %p91
      %p94 = scmp.ne.s32.totalorder %s77, %s93
      %p95 = scmp.eq.s32.totalorder %s27, 0
      %p96 = por %p94, %p95
      %s98 = sadd.s32 %s97, 1
      %p101 = scmp.eq.s32.totalorder %s21, 3
      %p102 = scmp.ne.s32.totalorder %s97, %s99
      %p103 = scmp.eq.s32.totalorder %s21, 0
      %p104 = por %p102, %p103
      %p105 = scmp.ne.s32.totalorder %s97, %s99
      %p106 = scmp.eq.s32.totalorder %s26, 3
      %p107 = por %p105, %p106
      %p108 = scmp.ne.s32.totalorder %s99, %s100
      %p109 = scmp.eq.s32.totalorder %s26, 0
      %p110 = por %p108, %p109
      %p111 = scmp.ne.s32.totalorder %s99, %s100
      %p112 = scmp.eq.s32.totalorder %s27, 3
      %p113 = por %p111, %p112
      %p115 = scmp.ne.s32.totalorder %s100, %s114
      %p116 = scmp.eq.s32.totalorder %s27, 0
      %p117 = por %p115, %p116
      %s119 = sadd.s32 %s118, 1
      %p122 = scmp.eq.s32.totalorder %s21, 3
      %p123 = scmp.ne.s32.totalorder %s118, %s120
      %p124 = scmp.eq.s32.totalorder %s21, 0
      %p125 = por %p123, %p124
      %p126 = scmp.ne.s32.totalorder %s118, %s120
      %p127 = scmp.eq.s32.totalorder %s26, 3
      %p128 = por %p126, %p127
      %p129 = scmp.ne.s32.totalorder %s120, %s121
      %p130 = scmp.eq.s32.totalorder %s26, 0
      %p131 = por %p129, %p130
      %p132 = scmp.ne.s32.totalorder %s120, %s121
      %p133 = scmp.eq.s32.totalorder %s27, 3
      %p134 = por %p132, %p133
      %p136 = scmp.ne.s32.totalorder %s121, %s135
      %p137 = scmp.eq.s32.totalorder %s27, 0
      %p138 = por %p136, %p137
      %s139 = ssub.s32 %s28, %s40
      %s140 = ssub.s32 %s29, %s36
      %s141 = sor.u32 %s139, %s140
      %p142 = scmp.eq.s32.totalorder %s141, 0
      %s144 = sadd.s32 %s143, 1
      %s145 = scalar_select %p142, %s143, %s144
      %p148 = pneg %p142
      %p149 = scmp.eq.s32.totalorder %s21, 3
      %p150 = por %p148, %p149
      %p151 = scmp.ne.s32.totalorder %s143, %s146
      %p152 = scmp.eq.s32.totalorder %s21, 0
      %p153 = por %p151, %p152
      %p154 = scmp.ne.s32.totalorder %s143, %s146
      %p155 = scmp.eq.s32.totalorder %s26, 3
      %p156 = por %p154, %p155
      %p157 = scmp.ne.s32.totalorder %s146, %s147
      %p158 = scmp.eq.s32.totalorder %s26, 0
      %p159 = por %p157, %p158
      %p160 = scmp.ne.s32.totalorder %s146, %s147
      %p161 = scmp.eq.s32.totalorder %s27, 3
      %p162 = por %p160, %p161
      %p164 = scmp.ne.s32.totalorder %s147, %s163
      %p165 = scmp.eq.s32.totalorder %s27, 0
      %p166 = por %p164, %p165
      %s167 = ssub.s32 %s28, %s40
      %s168 = ssub.s32 %s29, %s36
      %s169 = sor.u32 %s167, %s168
      %p170 = scmp.eq.s32.totalorder %s169, 0
      %s172 = sadd.s32 %s171, 1
      %s173 = scalar_select %p170, %s171, %s172
      %p176 = pneg %p170
      %p177 = scmp.eq.s32.totalorder %s21, 3
      %p178 = por %p176, %p177
      %p179 = scmp.ne.s32.totalorder %s171, %s174
      %p180 = scmp.eq.s32.totalorder %s21, 0
      %p181 = por %p179, %p180
      %p182 = scmp.ne.s32.totalorder %s171, %s174
      %p183 = scmp.eq.s32.totalorder %s26, 3
      %p184 = por %p182, %p183
      %p185 = scmp.ne.s32.totalorder %s174, %s175
      %p186 = scmp.eq.s32.totalorder %s26, 0
      %p187 = por %p185, %p186
      %p188 = scmp.ne.s32.totalorder %s174, %s175
      %p189 = scmp.eq.s32.totalorder %s27, 3
      %p190 = por %p188, %p189
      %p192 = scmp.ne.s32.totalorder %s175, %s191
      %p193 = scmp.eq.s32.totalorder %s27, 0
      %p194 = por %p192, %p193
      %p195 = scmp.le.s32.totalorder 1, %s21
      %p196 = scmp.lt.s32.totalorder %s21, 5
      %p197 = pnand %p195, %p196
      %p198 = pneg %p197
      // Predicated region
      $region9: #{tpu_custom_call.1} parent=5 // pred_check
        _
      $region10: #{tpu_custom_call.1} parent=5 // pred_check_branch
        %200 = sbr.rel (%p197) target = $region12
      $region11: #{tpu_custom_call.1} parent=5 // pred_region
        %s201 = ssub.s32 %s21, 1
        // Predicated region
        $region13: #{tpu_custom_call.1} parent=11 // pred_check
          %p202 = pneg %p110
        $region14: #{tpu_custom_call.1} parent=11 // pred_check_branch
          %204 = sbr.rel (%p202) target = $region16
        $region15: #{tpu_custom_call.1} parent=11 // pred_region
          _
        $region16: #{tpu_custom_call.1} parent=11 // pred_fallthru
          _
        // Predicated region
        $region17: #{tpu_custom_call.1} parent=11 // pred_check
          %p205 = pneg %p131
        $region18: #{tpu_custom_call.1} parent=11 // pred_check_branch
          %207 = sbr.rel (%p205) target = $region20
        $region19: #{tpu_custom_call.1} parent=11 // pred_region
          _
        $region20: #{tpu_custom_call.1} parent=11 // pred_fallthru
          _
      $region12: #{tpu_custom_call.1} parent=5 // pred_fallthru
        _
      %p208 = scmp.lt.s32.totalorder %s21, 4
      // Predicated region
      $region21: #{tpu_custom_call.1} parent=5 // pred_check
        %p209 = pneg %p208
      $region22: #{tpu_custom_call.1} parent=5 // pred_check_branch
        %211 = sbr.rel (%p209) target = $region24
      $region23: #{tpu_custom_call.1} parent=5 // pred_region
        // Predicated region
        $region25: #{tpu_custom_call.1} parent=23 // pred_check
          %p212 = pneg %p55
        $region26: #{tpu_custom_call.1} parent=23 // pred_check_branch
          %214 = sbr.rel (%p212) target = $region28
        $region27: #{tpu_custom_call.1} parent=23 // pred_region
          %s215 = sand.u32 %s45, 1
          %s216 = scalar_lea.sflag [#allocation3], %s215
          %s217 = sand.u32 %s45, 1
          %s218 = smul.addr %s217, 4
          %s219 = scalar_lea.vmem [#allocation2], %s218
          %s221 = ssub.s32 64, 64
          %222 = vsyncadd %s216, %s221
          %s223 = smul.addr %s28, 2
          %s224 = sadd.s32 %s29, %s223
          %s225 = smul.addr %s224, 64
          %s226 = scalar_lea.hbm %s0, %s225
          %s228 = sshll.u32 %s219, 4
          %s229 = int_to_ptr.vmem [resolvable:$true] %s228
          %231 = dma.hbm_to_vmem [thread:$0]  %s226, 64, %s229, %s216
        $region28: #{tpu_custom_call.1} parent=23 // pred_fallthru
          _
        // Predicated region
        $region29: #{tpu_custom_call.1} parent=23 // pred_check
          %p232 = pneg %p83
        $region30: #{tpu_custom_call.1} parent=23 // pred_check_branch
          %234 = sbr.rel (%p232) target = $region32
        $region31: #{tpu_custom_call.1} parent=23 // pred_region
          %p235 = scmp.lt.s32.totalorder %s28, 1
          %s236 = scalar_select %p235, %s28, 1
          %p237 = scmp.lt.s32.totalorder %s29, 1
          %s238 = scalar_select %p237, %s29, 1
          %s239 = smul.addr %s236, 2
          %s240 = sadd.s32 %s238, %s239
          %s241 = scalar_lea.vmem %s1, %s240
        $region32: #{tpu_custom_call.1} parent=23 // pred_fallthru
          _
      $region24: #{tpu_custom_call.1} parent=5 // pred_fallthru
        _
      %p242 = scmp.le.s32.totalorder 1, %s21
      %p243 = scmp.lt.s32.totalorder %s21, 5
      %p244 = pnand %p242, %p243
      %p245 = pneg %p244
      // Predicated region
      $region33: #{tpu_custom_call.1} parent=5 // pred_check
        _
      $region34: #{tpu_custom_call.1} parent=5 // pred_check_branch
        %247 = sbr.rel (%p244) target = $region36
      $region35: #{tpu_custom_call.1} parent=5 // pred_region
        %s248 = ssub.s32 %s21, 1
        %s249 = sand.u32 %s48, 1
        %s250 = scalar_lea.sflag [#allocation3], %s249
        %s251 = sand.u32 %s48, 1
        %s252 = smul.addr %s251, 4
        %s253 = scalar_lea.vmem [#allocation2], %s252
        // Predicated region
        $region37: #{tpu_custom_call.1} parent=35 // pred_check
          %p254 = pneg %p61
        $region38: #{tpu_custom_call.1} parent=35 // pred_check_branch
          %256 = sbr.rel (%p254) target = $region40
        $region39: #{tpu_custom_call.1} parent=35 // pred_region
          %257 = dma.done %s250, 64
        $region40: #{tpu_custom_call.1} parent=35 // pred_fallthru
          _
        %s258 = sand.u32 %s48, 1
        %s259 = scalar_lea.sflag [#allocation3], %s258
        %s260 = sand.u32 %s48, 1
        %s261 = smul.addr %s260, 4
        %s262 = scalar_lea.vmem [#allocation2], %s261
        %p263 = pneg %p61
        %p264 = pneg %p58
        %p265 = scmp.lt.s32.totalorder %s30, 1
        %s266 = scalar_select %p265, %s30, 1
        %p267 = scmp.lt.s32.totalorder %s31, 1
        %s268 = scalar_select %p267, %s31, 1
        %s269 = smul.addr %s266, 2
        %s270 = sadd.s32 %s268, %s269
        %s271 = scalar_lea.vmem %s1, %s270
        %p272 = pneg %p89
        %p273 = pneg %p86
        %p274 = pneg %p110
        %p275 = pneg %p107
        %p276 = pneg %p131
        %p277 = pneg %p128
        %p278 = pneg %p159
        %p279 = pneg %p156
        %s280 = sand.u32 %s146, 1
        %s281 = scalar_lea.sflag [#allocation4], %s280
        %s282 = sand.u32 %s146, 1
        %s283 = smul.addr %s282, 4
        %s284 = scalar_lea.vmem [#allocation5], %s283
        %p285 = pneg %p187
        %p286 = pneg %p184
        %s287 = sand.u32 %s174, 1
        %s288 = scalar_lea.sflag [#allocation7], %s287
        %s289 = sand.u32 %s174, 1
        %s290 = scalar_lea.vmem [#allocation6], %s289
        %p291 = scmp.lt.s32.totalorder %s30, 1
        %s292 = scalar_select %p291, %s30, 1
        %p293 = scmp.lt.s32.totalorder %s31, 1
        %s294 = scalar_select %p293, %s31, 1
        %s295 = smul.addr %s292, 2
        %s296 = sadd.s32 %s294, %s295
        %s297 = scalar_lea.vmem %s1, %s296
        %v298 = vld [vmem:[%s253] sm:$0xf]
        %v299 = vld [vmem:[%s297] sm:$0x1]
        %v300 = vld [vmem:[%s2] sm:$0xf]
        %v301 = vld [vmem:[%s3] sm:$0xf]
        %303 = vset.pattern.permute.xlu0 0
        %304 = vperm.xlu0 %303, %v301
        %v305 = vpop.permute.xlu0 %304
        %v307 = vmul.f32 %v305, %v298
        %309 = vset.pattern.permute.xlu0 0
        %310 = vperm.xlu0 %309, %v300
        %v311 = vpop.permute.xlu0 %310
        %v313 = vadd.f32 %v311, %v307
        %v315 = vlaneseq
        %v316 = vshrl.u32 %v315, 7
        %v317 = vsub.s32 0, %v316
        %v318 = vrot.slane %v299, %v317
        %v320 = vmul.f32 %v313, %v318
        %321 = vst [vmem:[%s284] sm:$0xf] %v320
        %s322 = smul.u32 %s31, 128
        %v323 = vlaneseq
        %v324 = vand.u32 %v323, 127
        %v325 = vstv %s322
        %v326 = vadd.s32 %v325, %v324
        %vm327 = vcmp.lt.s32.totalorder %v326, 200
        %v328 = vsel %vm327, %v299, 0.0
        %vm329 = vcmask 1040384
        %v330 = vsel %vm329, %v328, 0.0
        %331 = vadd.xlane.f32.xlu0 %v330
        %v332 = vpop.xlane.xlu0 %331
        %v333 = vrot.slane %v332, 4
        %v334 = vadd.f32 %v332, %v333
        %v335 = vrot.slane %v334, 2
        %v336 = vadd.f32 %v334, %v335
        %v337 = vrot.slane %v336, 1
        %v338 = vadd.f32 %v336, %v337
        %s339 = vtos %v338
        %v340 = vstv %s339
        %341 = vst [vmem:[%s290] sm:$0x1] %v340
        %s342 = sand.u32 %s146, 1
        %s343 = scalar_lea.sflag [#allocation4], %s342
        %s344 = sand.u32 %s146, 1
        %s345 = smul.addr %s344, 4
        %s346 = scalar_lea.vmem [#allocation5], %s345
        %s347 = sand.u32 %s174, 1
        %s348 = scalar_lea.sflag [#allocation7], %s347
        %s349 = sand.u32 %s174, 1
        %s350 = scalar_lea.vmem [#allocation6], %s349
        // Predicated region
        $region41: #{tpu_custom_call.1} parent=35 // pred_check
          %p351 = pneg %p156
        $region42: #{tpu_custom_call.1} parent=35 // pred_check_branch
          %353 = sbr.rel (%p351) target = $region44
        $region43: #{tpu_custom_call.1} parent=35 // pred_region
          %s355 = ssub.s32 64, 64
          %356 = vsyncadd %s343, %s355
          %s357 = smul.addr %s30, 2
          %s358 = sadd.s32 %s31, %s357
          %s359 = smul.addr %s358, 64
          %s360 = scalar_lea.hbm %s4, %s359
          %s362 = sshll.u32 %s346, 4
          %s363 = int_to_ptr.vmem [resolvable:$true] %s362
          %365 = dma.vmem_to_hbm [thread:$0]  %s363, 64, %s360, %s343
        $region44: #{tpu_custom_call.1} parent=35 // pred_fallthru
          _
        // Predicated region
        $region45: #{tpu_custom_call.1} parent=35 // pred_check
          %p366 = pneg %p184
        $region46: #{tpu_custom_call.1} parent=35 // pred_check_branch
          %368 = sbr.rel (%p366) target = $region48
        $region47: #{tpu_custom_call.1} parent=35 // pred_region
          %s370 = ssub.s32 16, 16
          %371 = vsyncadd %s348, %s370
          %s372 = smul.addr %s30, 2
          %s373 = sadd.s32 %s31, %s372
          %s374 = smul.addr %s373, 16
          %s375 = scalar_lea.hbm %s5, %s374
          %s377 = sshll.u32 %s350, 4
          %s378 = int_to_ptr.vmem [resolvable:$true] %s377
          %380 = dma.vmem_to_hbm [thread:$0]  %s378, 16, %s375, %s348
        $region48: #{tpu_custom_call.1} parent=35 // pred_fallthru
          _
      $region36: #{tpu_custom_call.1} parent=5 // pred_fallthru
        _
      %p381 = scmp.le.s32.totalorder 2, %s21
      // Predicated region
      $region49: #{tpu_custom_call.1} parent=5 // pred_check
        %p382 = pneg %p381
      $region50: #{tpu_custom_call.1} parent=5 // pred_check_branch
        %384 = sbr.rel (%p382) target = $region52
      $region51: #{tpu_custom_call.1} parent=5 // pred_region
        %s385 = ssub.s32 %s21, 2
        // Predicated region
        $region53: #{tpu_custom_call.1} parent=51 // pred_check
          %p386 = pneg %p162
        $region54: #{tpu_custom_call.1} parent=51 // pred_check_branch
          %388 = sbr.rel (%p386) target = $region56
        $region55: #{tpu_custom_call.1} parent=51 // pred_region
          %s389 = sand.u32 %s147, 1
          %s390 = scalar_lea.sflag [#allocation4], %s389
          %s391 = sand.u32 %s147, 1
          %s392 = smul.addr %s391, 4
          %s393 = scalar_lea.vmem [#allocation5], %s392
          %394 = dma.done %s390, 64
        $region56: #{tpu_custom_call.1} parent=51 // pred_fallthru
          _
        // Predicated region
        $region57: #{tpu_custom_call.1} parent=51 // pred_check
          %p395 = pneg %p190
        $region58: #{tpu_custom_call.1} parent=51 // pred_check_branch
          %397 = sbr.rel (%p395) target = $region60
        $region59: #{tpu_custom_call.1} parent=51 // pred_region
          %s398 = sand.u32 %s175, 1
          %s399 = scalar_lea.sflag [#allocation7], %s398
          %s400 = sand.u32 %s175, 1
          %s401 = scalar_lea.vmem [#allocation6], %s400
          %402 = dma.done %s399, 16
        $region60: #{tpu_custom_call.1} parent=51 // pred_fallthru
          _
      $region52: #{tpu_custom_call.1} parent=5 // pred_fallthru
        _
    $region6: #{tpu_custom_call.1} parent=1 // loop_footer
      %s25 = sadd.s32 1, %s21
    $region7: #{tpu_custom_call.1} parent=1 // loop_footer_branch
      %20 = sbr.rel target = $region3
    $region8: #{tpu_custom_call.1} parent=1 // loop_exit
      _
    %403 = vsyncpa [#allocation3], 1
    %s404 = scalar_lea.sflag [#allocation3], 1
    %405 = vsyncpa %s404, 1
    %406 = vsyncpa [#allocation4], 1
    %s407 = scalar_lea.sflag [#allocation4], 1
    %408 = vsyncpa %s407, 1
    %409 = vsyncpa [#allocation7], 1
    %s410 = scalar_lea.sflag [#allocation7], 1
    %411 = vsyncpa %s410, 1

</llo_original>
